<compile_context>
chip_gen: v7x
topology: tpu7x:2x2x1
jax: 0.10.0
libtpu: 0.0.40
codegen_flags: <defaults>
</compile_context>

<pallas_src>
import functools

import jax
import jax.numpy as jnp
from jax.experimental import pallas as pl
from jax.experimental.pallas import tpu as pltpu


def _round_up(n, m):
    return ((n + m - 1) // m) * m


def dqn_kernel(n_relu, x_ref, w1_ref, b1_ref, w2_ref, b2_ref, wh_ref, bh_ref,
               y_ref):
    # ---- fused preproc: one matmul over the block-diagonal weight ----------
    x = x_ref[...]
    z1 = (jnp.dot(x.astype(w1_ref.dtype), w1_ref[...],
                  preferred_element_type=jnp.float32)
          + b1_ref[...])
    # ReLU only on the first `n_relu` lanes; the last lane is the raw `c`
    # pass-through (must NOT be rectified).
    lane = jax.lax.broadcasted_iota(jnp.int32, z1.shape, dimension=1)
    h1 = jnp.where(lane < n_relu, jnp.maximum(z1, 0.0), z1)

    # ---- fc0: single K=97 matmul -------------------------------------------
    z2 = (jnp.dot(h1.astype(w2_ref.dtype), w2_ref[...],
                  preferred_element_type=jnp.float32)
          + b2_ref[...])
    h2 = jnp.maximum(z2, 0.0)

    # ---- head ---------------------------------------------------------------
    y_ref[...] = (jnp.dot(h2.astype(wh_ref.dtype), wh_ref[...],
                          preferred_element_type=jnp.float32)
                  + bh_ref[...]).astype(y_ref.dtype)


# --------------------------------------------------------------------------- #
# Parameters
# --------------------------------------------------------------------------- #
def _linear_params(key, fan_in, fan_out):
    # PyTorch nn.Linear default init: U(-1/sqrt(fan_in), 1/sqrt(fan_in)).
    kw, kb = jax.random.split(key)
    bound = 1.0 / jnp.sqrt(jnp.float32(fan_in))
    w = jax.random.uniform(kw, (fan_in, fan_out), jnp.float32, -bound, bound)
    b = jax.random.uniform(kb, (1, fan_out), jnp.float32, -bound, bound)
    return w, b


def make_dqn_params(key, n_omega, n_upsilon, preprocdim=32):
    keys = jax.random.split(key, 5)
    wp, bp = _linear_params(keys[0], n_omega, preprocdim)
    wr, br = _linear_params(keys[1], n_upsilon, preprocdim)
    woo, boo = _linear_params(keys[2], n_omega, preprocdim)
    w0, b0 = _linear_params(keys[3], preprocdim * 3 + 1, 128)
    wh, bh = _linear_params(keys[4], 128, 2)
    return dict(wp=wp, bp=bp, wr=wr, br=br, woo=woo, boo=boo,
                w0=w0, b0=b0, wh=wh, bh=bh)


def fuse_dqn_params(params, n_omega, n_upsilon, preprocdim=32):
    """Pack the three preproc Linears + c pass-through into one block-diagonal
    weight so the kernel issues a single MXU matmul for the first stage."""
    kp, kr, koo = n_omega, n_upsilon, n_omega
    K1 = kp + kr + koo + 1               # [p, r, oo, c]
    F1 = 3 * preprocdim + 1              # [p_h, r_h, oo_h, c]
    w1 = jnp.zeros((K1, F1), jnp.float32)
    w1 = w1.at[:kp, :preprocdim].set(params["wp"])
    w1 = w1.at[kp:kp + kr, preprocdim:2 * preprocdim].set(params["wr"])
    w1 = w1.at[kp + kr:kp + kr + koo,
               2 * preprocdim:3 * preprocdim].set(params["woo"])
    w1 = w1.at[K1 - 1, F1 - 1].set(1.0)  # identity column for c
    b1 = jnp.concatenate(
        [params["bp"], params["br"], params["boo"],
         jnp.zeros((1, 1), jnp.float32)], axis=1)
    return dict(w1=w1, b1=b1,
                w2=params["w0"], b2=params["b0"],
                wh=params["wh"], bh=params["bh"],
                n_relu=3 * preprocdim)


# --------------------------------------------------------------------------- #
# Forward
# --------------------------------------------------------------------------- #
def dqn_forward(x, fused, *, batch_tile=1024, use_bf16=False):
    """x: dict with 'p' [B,n_omega], 'r' [B,n_upsilon], 'oo' [B,n_omega],
    'c' [B,1]. Returns y [B,2] (float32)."""
    x_cat = jnp.concatenate(
        [x["p"], x["r"], x["oo"], x["c"]], axis=1).astype(jnp.float32)
    B, K1 = x_cat.shape

    # Batch tile: multiple of 8 (f32 sublane), capped so double-buffered tiles
    # + intermediates stay far under the v7x 64 MiB VMEM / 32 MiB scoped
    # default (1024 rows of f32 -> ~1.5 MB total).
    bt = _round_up(min(batch_tile, _round_up(B, 8)), 8)
    B_pad = _round_up(B, bt)
    if B_pad != B:
        x_cat = jnp.pad(x_cat, ((0, B_pad - B), (0, 0)))

    w1, b1 = fused["w1"], fused["b1"]
    w2, b2 = fused["w2"], fused["b2"]
    wh, bh = fused["wh"], fused["bh"]
    if use_bf16:
        # bf16 MXU inputs, f32 accumulation; biases / elementwise stay f32.
        x_cat = x_cat.astype(jnp.bfloat16)
        w1 = w1.astype(jnp.bfloat16)
        w2 = w2.astype(jnp.bfloat16)
        wh = wh.astype(jnp.bfloat16)

    F_out = wh.shape[1]
    grid = (B_pad // bt,)

    def wspec(arr):
        # Weights/biases: full-array block, constant index_map -> VMEM-resident.
        return pl.BlockSpec(arr.shape, lambda i: (0, 0))

    y = pl.pallas_call(
        functools.partial(dqn_kernel, int(fused["n_relu"])),
        out_shape=jax.ShapeDtypeStruct((B_pad, F_out), jnp.float32),
        grid=grid,
        in_specs=[
            pl.BlockSpec((bt, K1), lambda i: (i, 0)),
            wspec(w1), wspec(b1),
            wspec(w2), wspec(b2),
            wspec(wh), wspec(bh),
        ],
        out_specs=pl.BlockSpec((bt, F_out), lambda i: (i, 0)),
        compiler_params=pltpu.CompilerParams(
            dimension_semantics=("parallel",)),
    )(x_cat, w1, b1, w2, b2, wh, bh)

    return y[:B]


def dqn_reference(x, params):
    """Pure-JAX reference of the PyTorch forward (unfused)."""
    ph = jax.nn.relu(x["p"] @ params["wp"] + params["bp"])
    rh = jax.nn.relu(x["r"] @ params["wr"] + params["br"])
    ooh = jax.nn.relu(x["oo"] @ params["woo"] + params["boo"])
    h = jnp.concatenate([ph, rh, ooh, x["c"]], axis=1)
    h = jax.nn.relu(h @ params["w0"] + params["b0"])
    return h @ params["wh"] + params["bh"]


if __name__ == "__main__":
    key = jax.random.PRNGKey(0)
    k_par, k_p, k_r, k_oo, k_c = jax.random.split(key, 5)

    B = 8
    n_omega = 16
    n_upsilon = 8
    preprocdim = 32

    params = make_dqn_params(k_par, n_omega, n_upsilon, preprocdim)
    fused = fuse_dqn_params(params, n_omega, n_upsilon, preprocdim)

    x = {
        "p": jax.random.normal(k_p, (B, n_omega), jnp.float32),
        "r": jax.random.normal(k_r, (B, n_upsilon), jnp.float32),
        "oo": jax.random.normal(k_oo, (B, n_omega), jnp.float32),
        "c": jax.random.normal(k_c, (B, 1), jnp.float32),
    }

    y = dqn_forward(x, fused)
    y = jax.block_until_ready(y)

    y_ref = dqn_reference(x, params)
    assert y.shape == (B, 2)
    assert jnp.allclose(y, y_ref, atol=1e-4, rtol=1e-4), float(
        jnp.max(jnp.abs(y - y_ref)))

    print("KERNEL_OK")
</pallas_src>

<mosaic_0001>
module attributes {stable_mosaic.version = 11 : i64} {
  func.func @dqn_kernel(%arg0: i32, %arg1: memref<8x41xf32, #tpu.memory_space<vmem>>, %arg2: memref<41x97xf32, #tpu.memory_space<vmem>>, %arg3: memref<1x97xf32, #tpu.memory_space<vmem>>, %arg4: memref<97x128xf32, #tpu.memory_space<vmem>>, %arg5: memref<1x128xf32, #tpu.memory_space<vmem>>, %arg6: memref<128x2xf32, #tpu.memory_space<vmem>>, %arg7: memref<1x2xf32, #tpu.memory_space<vmem>>, %arg8: memref<8x2xf32, #tpu.memory_space<vmem>>) attributes {dimension_semantics = [#tpu.dimension_semantics<parallel>], iteration_bounds = array<i64: 1>, scalar_prefetch = 0 : i64, scratch_operands = 0 : i64, tpu.core_type = #tpu.core_type<tc>, window_params = [{transform_indices = @transform_0, window_bounds = array<i64: 8, 41>}, {pipeline_mode = #tpu.pipeline_mode<synchronous>, transform_indices = @transform_1, window_bounds = array<i64: 41, 97>}, {pipeline_mode = #tpu.pipeline_mode<synchronous>, transform_indices = @transform_2, window_bounds = array<i64: 1, 97>}, {pipeline_mode = #tpu.pipeline_mode<synchronous>, transform_indices = @transform_3, window_bounds = array<i64: 97, 128>}, {pipeline_mode = #tpu.pipeline_mode<synchronous>, transform_indices = @transform_4, window_bounds = array<i64: 1, 128>}, {pipeline_mode = #tpu.pipeline_mode<synchronous>, transform_indices = @transform_5, window_bounds = array<i64: 128, 2>}, {pipeline_mode = #tpu.pipeline_mode<synchronous>, transform_indices = @transform_6, window_bounds = array<i64: 1, 2>}, {transform_indices = @transform_7, window_bounds = array<i64: 8, 2>}]} {
    %c0 = arith.constant 0 : index
    %c0_0 = arith.constant 0 : index
    %0 = vector.load %arg1[%c0, %c0_0] : memref<8x41xf32, #tpu.memory_space<vmem>>, vector<8x41xf32>
    %c0_1 = arith.constant 0 : index
    %c0_2 = arith.constant 0 : index
    %1 = vector.load %arg2[%c0_1, %c0_2] : memref<41x97xf32, #tpu.memory_space<vmem>>, vector<41x97xf32>
    %cst = arith.constant dense<0.000000e+00> : vector<8x97xf32>
    %2 = tpu.matmul %0, %1, %cst {dimension_numbers = #tpu.dot_dimension_numbers<[1], [0], [0], [1], [0, 0, 1, 1], [], []>} : vector<8x41xf32>, vector<41x97xf32>, vector<8x97xf32> -> vector<8x97xf32>
    %c0_3 = arith.constant 0 : index
    %c0_4 = arith.constant 0 : index
    %3 = vector.load %arg3[%c0_3, %c0_4] : memref<1x97xf32, #tpu.memory_space<vmem>>, vector<1x97xf32>
    %4 = vector.broadcast %3 : vector<1x97xf32> to vector<8x97xf32>
    %5 = arith.addf %2, %4 : vector<8x97xf32>
    %6 = tpu.iota {dimensions = array<i32: 1>} : vector<8x97xi32>
    %c96_i32 = arith.constant 96 : i32
    %7 = vector.broadcast %c96_i32 : i32 to vector<8x97xi32>
    %8 = arith.cmpi slt, %6, %7 : vector<8x97xi32>
    %cst_5 = arith.constant 0.000000e+00 : f32
    %9 = vector.broadcast %cst_5 : f32 to vector<8x97xf32>
    %10 = arith.maximumf %5, %9 : vector<8x97xf32>
    %11 = arith.select %8, %10, %5 : vector<8x97xi1>, vector<8x97xf32>
    %c0_6 = arith.constant 0 : index
    %c0_7 = arith.constant 0 : index
    %12 = vector.load %arg4[%c0_6, %c0_7] : memref<97x128xf32, #tpu.memory_space<vmem>>, vector<97x128xf32>
    %cst_8 = arith.constant dense<0.000000e+00> : vector<8x128xf32>
    %13 = tpu.matmul %11, %12, %cst_8 {dimension_numbers = #tpu.dot_dimension_numbers<[1], [0], [0], [1], [0, 0, 1, 1], [], []>} : vector<8x97xf32>, vector<97x128xf32>, vector<8x128xf32> -> vector<8x128xf32>
    %c0_9 = arith.constant 0 : index
    %c0_10 = arith.constant 0 : index
    %14 = vector.load %arg5[%c0_9, %c0_10] : memref<1x128xf32, #tpu.memory_space<vmem>>, vector<1x128xf32>
    %15 = vector.broadcast %14 : vector<1x128xf32> to vector<8x128xf32>
    %16 = arith.addf %13, %15 : vector<8x128xf32>
    %cst_11 = arith.constant 0.000000e+00 : f32
    %17 = vector.broadcast %cst_11 : f32 to vector<8x128xf32>
    %18 = arith.maximumf %16, %17 : vector<8x128xf32>
    %c0_12 = arith.constant 0 : index
    %c0_13 = arith.constant 0 : index
    %19 = vector.load %arg6[%c0_12, %c0_13] : memref<128x2xf32, #tpu.memory_space<vmem>>, vector<128x2xf32>
    %cst_14 = arith.constant dense<0.000000e+00> : vector<8x2xf32>
    %20 = tpu.matmul %18, %19, %cst_14 {dimension_numbers = #tpu.dot_dimension_numbers<[1], [0], [0], [1], [0, 0, 1, 1], [], []>} : vector<8x128xf32>, vector<128x2xf32>, vector<8x2xf32> -> vector<8x2xf32>
    %c0_15 = arith.constant 0 : index
    %c0_16 = arith.constant 0 : index
    %21 = vector.load %arg7[%c0_15, %c0_16] : memref<1x2xf32, #tpu.memory_space<vmem>>, vector<1x2xf32>
    %22 = vector.broadcast %21 : vector<1x2xf32> to vector<8x2xf32>
    %23 = arith.addf %20, %22 : vector<8x2xf32>
    %c0_17 = arith.constant 0 : index
    %c0_18 = arith.constant 0 : index
    %24 = vector.load %arg8[%c0_17, %c0_18] : memref<8x2xf32, #tpu.memory_space<vmem>>, vector<8x2xf32>
    tpu.vector_store %arg8[%c0_17, %c0_18], %23 {strides = array<i32>} : memref<8x2xf32, #tpu.memory_space<vmem>>, vector<8x2xf32>,
    return
  }
  func.func @transform_0(%arg0: i32) -> (i32, i32) {
    %c0_i32 = arith.constant 0 : i32
    %c0_i32_0 = arith.constant 0 : i32
    return %arg0, %c0_i32 : i32, i32
  }
  func.func @transform_1(%arg0: i32) -> (i32, i32) {
    %c0_i32 = arith.constant 0 : i32
    %c0_i32_0 = arith.constant 0 : i32
    %c0_i32_1 = arith.constant 0 : i32
    return %c0_i32, %c0_i32_0 : i32, i32
  }
  func.func @transform_2(%arg0: i32) -> (i32, i32) {
    %c0_i32 = arith.constant 0 : i32
    %c0_i32_0 = arith.constant 0 : i32
    %c0_i32_1 = arith.constant 0 : i32
    return %c0_i32, %c0_i32_0 : i32, i32
  }
  func.func @transform_3(%arg0: i32) -> (i32, i32) {
    %c0_i32 = arith.constant 0 : i32
    %c0_i32_0 = arith.constant 0 : i32
    %c0_i32_1 = arith.constant 0 : i32
    return %c0_i32, %c0_i32_0 : i32, i32
  }
  func.func @transform_4(%arg0: i32) -> (i32, i32) {
    %c0_i32 = arith.constant 0 : i32
    %c0_i32_0 = arith.constant 0 : i32
    %c0_i32_1 = arith.constant 0 : i32
    return %c0_i32, %c0_i32_0 : i32, i32
  }
  func.func @transform_5(%arg0: i32) -> (i32, i32) {
    %c0_i32 = arith.constant 0 : i32
    %c0_i32_0 = arith.constant 0 : i32
    %c0_i32_1 = arith.constant 0 : i32
    return %c0_i32, %c0_i32_0 : i32, i32
  }
  func.func @transform_6(%arg0: i32) -> (i32, i32) {
    %c0_i32 = arith.constant 0 : i32
    %c0_i32_0 = arith.constant 0 : i32
    %c0_i32_1 = arith.constant 0 : i32
    return %c0_i32, %c0_i32_0 : i32, i32
  }
  func.func @transform_7(%arg0: i32) -> (i32, i32) {
    %c0_i32 = arith.constant 0 : i32
    %c0_i32_0 = arith.constant 0 : i32
    return %arg0, %c0_i32 : i32, i32
  }
}

</mosaic_0001>

<llo_original>
// kernel: tpu_custom_call.1
$region0: #{tpu_custom_call.1}
  #allocation0 [shape = 'u32[]', space=smem, size = 0x4, offset = 0x4, fixed_abs, tag = 'smem constant byte address 0x4 - core index']
  #allocation1 [shape = 'u32[144,128]{1,0:T(1,128)}', space=vmem, size = 0x12000, scoped, tag = 'internal scratch']
  %s0 = inlined_call_operand.vmem [shape: f32[8,41], index: 0, kind: input, shape index: {}]
  %s1 = inlined_call_operand.hbm [shape: f32[41,97], index: 1, kind: input, shape index: {}]
  %s2 = inlined_call_operand.vmem [shape: f32[1,97], index: 2, kind: input, shape index: {}]
  %s3 = inlined_call_operand.vmem [shape: f32[97,128], index: 3, kind: input, shape index: {}]
  %s4 = inlined_call_operand.vmem [shape: f32[1,128], index: 4, kind: input, shape index: {}]
  %s5 = inlined_call_operand.vmem [shape: f32[128,2], index: 5, kind: input, shape index: {}]
  %s6 = inlined_call_operand.vmem [shape: f32[1,2], index: 6, kind: input, shape index: {}]
  %s7 = inlined_call_operand.vmem [shape: f32[8,2], index: 7, kind: output, shape index: {}]
  %s8 = sld [smem:[#allocation0]]
  $region42: #{tpu_custom_call.1} parent=0
    _
  %s10 = ssub.s32 1, %s8
  %s11 = scalar_select 0, %s10, %s8
  $region1: #{tpu_custom_call.1} parent=0
    #allocation2 [shape = 'u8[24576]{0}', space=vmem, size = 0x6000, scoped, tag = 'input window, operand 1, single buffered']
    #allocation3 [shape = 's32[1]{0}', space=sflag, size = 0x4, scoped, tag = 'scoped memory for tpu_custom_call.1']
    %12 = vsyncpa [#allocation3], 0
    // Predicated region
    $region2: #{tpu_custom_call.1} parent=1 // pred_check
      _
    $region3: #{tpu_custom_call.1} parent=1 // pred_check_branch
      %14 = sbr.rel (0) target = $region5
    $region4: #{tpu_custom_call.1} parent=1 // pred_region
      _
    $region5: #{tpu_custom_call.1} parent=1 // pred_fallthru
      _
    // Predicated region
    $region6: #{tpu_custom_call.1} parent=1 // pred_check
      _
    $region7: #{tpu_custom_call.1} parent=1 // pred_check_branch
      %16 = sbr.rel (0) target = $region9
    $region8: #{tpu_custom_call.1} parent=1 // pred_region
      %s18 = ssub.s32 768, 768
      %19 = vsyncadd [#allocation3], %s18
      %s20 = sshll.u32 [#allocation2], 4
      %s21 = int_to_ptr.vmem [resolvable:$true] %s20
      %26 = dma.hbm_to_vmem [thread:$0]  %s1, 768, %s21, [#allocation3], 128, 128, 8
    $region9: #{tpu_custom_call.1} parent=1 // pred_fallthru
      _
    // Predicated region
    $region10: #{tpu_custom_call.1} parent=1 // pred_check
      _
    $region11: #{tpu_custom_call.1} parent=1 // pred_check_branch
      %28 = sbr.rel (0) target = $region13
    $region12: #{tpu_custom_call.1} parent=1 // pred_region
      _
    $region13: #{tpu_custom_call.1} parent=1 // pred_fallthru
      _
    // Predicated region
    $region14: #{tpu_custom_call.1} parent=1 // pred_check
      _
    $region15: #{tpu_custom_call.1} parent=1 // pred_check_branch
      %30 = sbr.rel (0) target = $region17
    $region16: #{tpu_custom_call.1} parent=1 // pred_region
      _
    $region17: #{tpu_custom_call.1} parent=1 // pred_fallthru
      _
    // Predicated region
    $region18: #{tpu_custom_call.1} parent=1 // pred_check
      _
    $region19: #{tpu_custom_call.1} parent=1 // pred_check_branch
      %32 = sbr.rel (0) target = $region21
    $region20: #{tpu_custom_call.1} parent=1 // pred_region
      _
    $region21: #{tpu_custom_call.1} parent=1 // pred_fallthru
      _
    // Predicated region
    $region22: #{tpu_custom_call.1} parent=1 // pred_check
      _
    $region23: #{tpu_custom_call.1} parent=1 // pred_check_branch
      %34 = sbr.rel (0) target = $region25
    $region24: #{tpu_custom_call.1} parent=1 // pred_region
      _
    $region25: #{tpu_custom_call.1} parent=1 // pred_fallthru
      _
    // Predicated region
    $region26: #{tpu_custom_call.1} parent=1 // pred_check
      _
    $region27: #{tpu_custom_call.1} parent=1 // pred_check_branch
      %36 = sbr.rel (0) target = $region29
    $region28: #{tpu_custom_call.1} parent=1 // pred_region
      _
    $region29: #{tpu_custom_call.1} parent=1 // pred_fallthru
      _
    // Predicated region
    $region30: #{tpu_custom_call.1} parent=1 // pred_check
      _
    $region31: #{tpu_custom_call.1} parent=1 // pred_check_branch
      %38 = sbr.rel (0) target = $region33
    $region32: #{tpu_custom_call.1} parent=1 // pred_region
      %39 = dma.done [#allocation3], 768
    $region33: #{tpu_custom_call.1} parent=1 // pred_fallthru
      _
    %v40 = vld [vmem:[%s0] sm:$0xff]
    %v41 = vld [vmem:[#allocation2] sm:$0xff]
    %v42 = vld [vmem:[#allocation2 + $0x8] sm:$0xff]
    %v43 = vld [vmem:[#allocation2 + $0x10] sm:$0xff]
    %v44 = vld [vmem:[#allocation2 + $0x18] sm:$0xff]
    %v45 = vld [vmem:[#allocation2 + $0x20] sm:$0xff]
    %v46 = vld [vmem:[#allocation2 + $0x28] sm:$0x1]
    %v47 = vld [vmem:[%s2] sm:$0x1]
    %v49 = vlaneseq
    %v50 = vshrl.u32 %v49, 7
    %v51 = vsub.s32 0, %v50
    %v52 = vrot.slane %v47, %v51
    %vm54 = vcmask 334848
    %v56 = vsel %vm54, %v40, 0
    %vm58 = vcmask 1040384
    %v60 = vsel %vm58, %v46, 0
    %62 = vmatprep.subr.mxu0 0.0
    %63 = vmatpush1.msra.mxu0 %v41
    %64 = vmatprep.subr.mxu0 0.0
    %65 = vmatpush1.msra.mxu0 %v42
    %66 = vmatprep.subr.mxu0 0.0
    %67 = vmatpush1.msra.mxu0 %v43
    %68 = vmatprep.subr.mxu0 0.0
    %69 = vmatpush1.msra.mxu0 %v44
    %70 = vmatprep.subr.mxu0 0.0
    %71 = vmatpush1.msra.mxu0 %v45
    %72 = vmatprep.subr.mxu0 0.0
    %73 = vmatpush1.msra.mxu0 %v60
    %74 = vmatprep.subr.mxu0 0.0
    %75 = vmatpush1.msra.mxu0 0.0
    %76 = vmatprep.subr.mxu0 0.0
    %77 = vmatpush1.msra.mxu0 0.0
    %78 = vmatprep.subr.mxu0 0.0
    %79 = vmatpush1.msra.mxu0 0.0
    %80 = vmatprep.subr.mxu0 0.0
    %81 = vmatpush1.msra.mxu0 0.0
    %82 = vmatprep.subr.mxu0 0.0
    %83 = vmatpush1.msra.mxu0 0.0
    %84 = vmatprep.subr.mxu0 0.0
    %85 = vmatpush1.msra.mxu0 0.0
    %86 = vmatprep.subr.mxu0 0.0
    %87 = vmatpush1.msra.mxu0 0.0
    %88 = vmatprep.subr.mxu0 0.0
    %89 = vmatpush1.msra.mxu0 0.0
    %90 = vmatprep.subr.mxu0 0.0
    %91 = vmatpush1.msra.mxu0 0.0
    %92 = vmatprep.subr.mxu0 0.0
    %93 = vmatpush1.msra.mxu0 0.0
    %94 = vmatprep.subr.mxu0 0.0
    %95 = vmatpush1.msra.mxu0 0.0
    %96 = vmatprep.subr.mxu0 0.0
    %97 = vmatpush1.msra.mxu0 0.0
    %98 = vmatprep.subr.mxu0 0.0
    %99 = vmatpush1.msra.mxu0 0.0
    %100 = vmatprep.subr.mxu0 0.0
    %101 = vmatpush1.msra.mxu0 0.0
    %102 = vmatprep.subr.mxu0 0.0
    %103 = vmatpush1.msra.mxu0 0.0
    %104 = vmatprep.subr.mxu0 0.0
    %105 = vmatpush1.msra.mxu0 0.0
    %106 = vmatprep.subr.mxu0 0.0
    %107 = vmatpush1.msra.mxu0 0.0
    %108 = vmatprep.subr.mxu0 0.0
    %109 = vmatpush1.msra.mxu0 0.0
    %110 = vmatprep.subr.mxu0 0.0
    %111 = vmatpush1.msra.mxu0 0.0
    %112 = vmatprep.subr.mxu0 0.0
    %113 = vmatpush1.msra.mxu0 0.0
    %114 = vmatprep.subr.mxu0 0.0
    %115 = vmatpush1.msra.mxu0 0.0
    %116 = vmatprep.subr.mxu0 0.0
    %117 = vmatpush1.msra.mxu0 0.0
    %118 = vmatprep.subr.mxu0 0.0
    %119 = vmatpush1.msra.mxu0 0.0
    %120 = vmatprep.subr.mxu0 0.0
    %121 = vmatpush1.msra.mxu0 0.0
    %122 = vmatprep.subr.mxu0 0.0
    %123 = vmatpush1.msra.mxu0 0.0
    %124 = vmatprep.subr.mxu0 0.0
    %125 = vmatpush1.msra.mxu0 0.0
    %126 = vmatprep.mubr.f32.mxu0 0.0
    %127 = vmatmul.mubr.f32.gmra.mrb[0].mxu0 %v56
    %v128 = vpop.f32.mrb[0].mxu0
    %v129 = vadd.f32 %v52, %v128
    %v130 = vpop.f32.mrb[0].mxu0
    %131 = vdwg.mxu0
    %v132 = vlaneseq
    %v133 = vand.u32 %v132, 127
    %vm134 = vcmp.lt.s32.totalorder %v133, 96
    %v135 = vmax.f32 %v129, 0.0
    %v136 = vsel %vm134, %v135, %v129
    %v137 = vld [vmem:[%s3] sm:$0xff]
    %v138 = vld [vmem:[%s3 + $0x8] sm:$0xff]
    %v139 = vld [vmem:[%s3 + $0x10] sm:$0xff]
    %v140 = vld [vmem:[%s3 + $0x18] sm:$0xff]
    %v141 = vld [vmem:[%s3 + $0x20] sm:$0xff]
    %v142 = vld [vmem:[%s3 + $0x28] sm:$0xff]
    %v143 = vld [vmem:[%s3 + $0x30] sm:$0xff]
    %v144 = vld [vmem:[%s3 + $0x38] sm:$0xff]
    %v145 = vld [vmem:[%s3 + $0x40] sm:$0xff]
    %v146 = vld [vmem:[%s3 + $0x48] sm:$0xff]
    %v147 = vld [vmem:[%s3 + $0x50] sm:$0xff]
    %v148 = vld [vmem:[%s3 + $0x58] sm:$0xff]
    %v149 = vld [vmem:[%s3 + $0x60] sm:$0x1]
    %v150 = vld [vmem:[%s4] sm:$0x1]
    %v152 = vlaneseq
    %v153 = vshrl.u32 %v152, 7
    %v154 = vsub.s32 0, %v153
    %v155 = vrot.slane %v150, %v154
    %vm157 = vcmask 793600
    %v159 = vsel %vm157, %v136, 0
    %v162 = vsel %vm58, %v149, 0
    %164 = vmatprep.subr.mxu0 0.0
    %165 = vmatpush1.msra.mxu0 %v137
    %166 = vmatprep.subr.mxu0 0.0
    %167 = vmatpush1.msra.mxu0 %v138
    %168 = vmatprep.subr.mxu0 0.0
    %169 = vmatpush1.msra.mxu0 %v139
    %170 = vmatprep.subr.mxu0 0.0
    %171 = vmatpush1.msra.mxu0 %v140
    %172 = vmatprep.subr.mxu0 0.0
    %173 = vmatpush1.msra.mxu0 %v141
    %174 = vmatprep.subr.mxu0 0.0
    %175 = vmatpush1.msra.mxu0 %v142
    %176 = vmatprep.subr.mxu0 0.0
    %177 = vmatpush1.msra.mxu0 %v143
    %178 = vmatprep.subr.mxu0 0.0
    %179 = vmatpush1.msra.mxu0 %v144
    %180 = vmatprep.subr.mxu0 0.0
    %181 = vmatpush1.msra.mxu0 %v145
    %182 = vmatprep.subr.mxu0 0.0
    %183 = vmatpush1.msra.mxu0 %v146
    %184 = vmatprep.subr.mxu0 0.0
    %185 = vmatpush1.msra.mxu0 %v147
    %186 = vmatprep.subr.mxu0 0.0
    %187 = vmatpush1.msra.mxu0 %v148
    %188 = vmatprep.subr.mxu0 0.0
    %189 = vmatpush1.msra.mxu0 %v162
    %190 = vmatprep.subr.mxu0 0.0
    %191 = vmatpush1.msra.mxu0 0.0
    %192 = vmatprep.subr.mxu0 0.0
    %193 = vmatpush1.msra.mxu0 0.0
    %194 = vmatprep.subr.mxu0 0.0
    %195 = vmatpush1.msra.mxu0 0.0
    %196 = vmatprep.subr.mxu0 0.0
    %197 = vmatpush1.msra.mxu0 0.0
    %198 = vmatprep.subr.mxu0 0.0
    %199 = vmatpush1.msra.mxu0 0.0
    %200 = vmatprep.subr.mxu0 0.0
    %201 = vmatpush1.msra.mxu0 0.0
    %202 = vmatprep.subr.mxu0 0.0
    %203 = vmatpush1.msra.mxu0 0.0
    %204 = vmatprep.subr.mxu0 0.0
    %205 = vmatpush1.msra.mxu0 0.0
    %206 = vmatprep.subr.mxu0 0.0
    %207 = vmatpush1.msra.mxu0 0.0
    %208 = vmatprep.subr.mxu0 0.0
    %209 = vmatpush1.msra.mxu0 0.0
    %210 = vmatprep.subr.mxu0 0.0
    %211 = vmatpush1.msra.mxu0 0.0
    %212 = vmatprep.subr.mxu0 0.0
    %213 = vmatpush1.msra.mxu0 0.0
    %214 = vmatprep.subr.mxu0 0.0
    %215 = vmatpush1.msra.mxu0 0.0
    %216 = vmatprep.subr.mxu0 0.0
    %217 = vmatpush1.msra.mxu0 0.0
    %218 = vmatprep.subr.mxu0 0.0
    %219 = vmatpush1.msra.mxu0 0.0
    %220 = vmatprep.subr.mxu0 0.0
    %221 = vmatpush1.msra.mxu0 0.0
    %222 = vmatprep.subr.mxu0 0.0
    %223 = vmatpush1.msra.mxu0 0.0
    %224 = vmatprep.subr.mxu0 0.0
    %225 = vmatpush1.msra.mxu0 0.0
    %226 = vmatprep.subr.mxu0 0.0
    %227 = vmatpush1.msra.mxu0 0.0
    %228 = vmatprep.mubr.f32.mxu0 0.0
    %229 = vmatmul.mubr.f32.gmra.mrb[0].mxu0 %v159
    %v230 = vpop.f32.mrb[0].mxu0
    %v231 = vadd.f32 %v155, %v230
    %v232 = vpop.f32.mrb[0].mxu0
    %233 = vdwg.mxu0
    %v234 = vmax.f32 %v231, 0.0
    %v235 = vld [vmem:[%s5] sm:$0xff]
    %v236 = vld [vmem:[%s5 + $0x8] sm:$0xff]
    %v237 = vld [vmem:[%s5 + $0x10] sm:$0xff]
    %v238 = vld [vmem:[%s5 + $0x18] sm:$0xff]
    %v239 = vld [vmem:[%s5 + $0x20] sm:$0xff]
    %v240 = vld [vmem:[%s5 + $0x28] sm:$0xff]
    %v241 = vld [vmem:[%s5 + $0x30] sm:$0xff]
    %v242 = vld [vmem:[%s5 + $0x38] sm:$0xff]
    %v243 = vld [vmem:[%s5 + $0x40] sm:$0xff]
    %v244 = vld [vmem:[%s5 + $0x48] sm:$0xff]
    %v245 = vld [vmem:[%s5 + $0x50] sm:$0xff]
    %v246 = vld [vmem:[%s5 + $0x58] sm:$0xff]
    %v247 = vld [vmem:[%s5 + $0x60] sm:$0xff]
    %v248 = vld [vmem:[%s5 + $0x68] sm:$0xff]
    %v249 = vld [vmem:[%s5 + $0x70] sm:$0xff]
    %v250 = vld [vmem:[%s5 + $0x78] sm:$0xff]
    %v251 = vld [vmem:[%s6] sm:$0x1]
    %v253 = vlaneseq
    %v254 = vshrl.u32 %v253, 7
    %v255 = vsub.s32 0, %v254
    %v256 = vrot.slane %v251, %v255
    %258 = vmatprep.subr.mxu0 0.0
    %259 = vmatpush1.msra.mxu0 %v235
    %260 = vmatprep.subr.mxu0 0.0
    %261 = vmatpush1.msra.mxu0 %v236
    %262 = vmatprep.subr.mxu0 0.0
    %263 = vmatpush1.msra.mxu0 %v237
    %264 = vmatprep.subr.mxu0 0.0
    %265 = vmatpush1.msra.mxu0 %v238
    %266 = vmatprep.subr.mxu0 0.0
    %267 = vmatpush1.msra.mxu0 %v239
    %268 = vmatprep.subr.mxu0 0.0
    %269 = vmatpush1.msra.mxu0 %v240
    %270 = vmatprep.subr.mxu0 0.0
    %271 = vmatpush1.msra.mxu0 %v241
    %272 = vmatprep.subr.mxu0 0.0
    %273 = vmatpush1.msra.mxu0 %v242
    %274 = vmatprep.subr.mxu0 0.0
    %275 = vmatpush1.msra.mxu0 %v243
    %276 = vmatprep.subr.mxu0 0.0
    %277 = vmatpush1.msra.mxu0 %v244
    %278 = vmatprep.subr.mxu0 0.0
    %279 = vmatpush1.msra.mxu0 %v245
    %280 = vmatprep.subr.mxu0 0.0
    %281 = vmatpush1.msra.mxu0 %v246
    %282 = vmatprep.subr.mxu0 0.0
    %283 = vmatpush1.msra.mxu0 %v247
    %284 = vmatprep.subr.mxu0 0.0
    %285 = vmatpush1.msra.mxu0 %v248
    %286 = vmatprep.subr.mxu0 0.0
    %287 = vmatpush1.msra.mxu0 %v249
    %288 = vmatprep.subr.mxu0 0.0
    %289 = vmatpush1.msra.mxu0 %v250
    %290 = vmatprep.subr.mxu0 0.0
    %291 = vmatpush1.msra.mxu0 0.0
    %292 = vmatprep.subr.mxu0 0.0
    %293 = vmatpush1.msra.mxu0 0.0
    %294 = vmatprep.subr.mxu0 0.0
    %295 = vmatpush1.msra.mxu0 0.0
    %296 = vmatprep.subr.mxu0 0.0
    %297 = vmatpush1.msra.mxu0 0.0
    %298 = vmatprep.subr.mxu0 0.0
    %299 = vmatpush1.msra.mxu0 0.0
    %300 = vmatprep.subr.mxu0 0.0
    %301 = vmatpush1.msra.mxu0 0.0
    %302 = vmatprep.subr.mxu0 0.0
    %303 = vmatpush1.msra.mxu0 0.0
    %304 = vmatprep.subr.mxu0 0.0
    %305 = vmatpush1.msra.mxu0 0.0
    %306 = vmatprep.subr.mxu0 0.0
    %307 = vmatpush1.msra.mxu0 0.0
    %308 = vmatprep.subr.mxu0 0.0
    %309 = vmatpush1.msra.mxu0 0.0
    %310 = vmatprep.subr.mxu0 0.0
    %311 = vmatpush1.msra.mxu0 0.0
    %312 = vmatprep.subr.mxu0 0.0
    %313 = vmatpush1.msra.mxu0 0.0
    %314 = vmatprep.subr.mxu0 0.0
    %315 = vmatpush1.msra.mxu0 0.0
    %316 = vmatprep.subr.mxu0 0.0
    %317 = vmatpush1.msra.mxu0 0.0
    %318 = vmatprep.subr.mxu0 0.0
    %319 = vmatpush1.msra.mxu0 0.0
    %320 = vmatprep.subr.mxu0 0.0
    %321 = vmatpush1.msra.mxu0 0.0
    %322 = vmatprep.mubr.f32.mxu0 0.0
    %323 = vmatmul.mubr.f32.gmra.mrb[0].mxu0 %v234
    %v324 = vpop.f32.mrb[0].mxu0
    %v325 = vadd.f32 %v256, %v324
    %v326 = vpop.f32.mrb[0].mxu0
    %327 = vdwg.mxu0
    %vm328 = vcmask 15360
    %329 = vst.msk [vmem:[%s7] sm:$0xff] %vm328, %v325
    // Predicated region
    $region34: #{tpu_custom_call.1} parent=1 // pred_check
      _
    $region35: #{tpu_custom_call.1} parent=1 // pred_check_branch
      %331 = sbr.rel (0) target = $region37
    $region36: #{tpu_custom_call.1} parent=1 // pred_region
      _
    $region37: #{tpu_custom_call.1} parent=1 // pred_fallthru
      _
    // Predicated region
    $region38: #{tpu_custom_call.1} parent=1 // pred_check
      _
    $region39: #{tpu_custom_call.1} parent=1 // pred_check_branch
      %333 = sbr.rel (0) target = $region41
    $region40: #{tpu_custom_call.1} parent=1 // pred_region
      _
    $region41: #{tpu_custom_call.1} parent=1 // pred_fallthru
      _
    %334 = vsyncpa [#allocation3], 1

</llo_original>
